<compile_context>
chip_gen: v7x
topology: tpu7x:2x2x1
jax: 0.10.0
libtpu: 0.0.40
codegen_flags: <defaults>
</compile_context>

<pallas_src>
import functools

import jax
import jax.numpy as jnp
import numpy as np
from jax.experimental import pallas as pl
from jax.experimental.pallas import tpu as pltpu


def _batch_std_kernel(x_ref, o_ref, acc_ref, *, eps, groups, d_valid, tile_d,
                      tiles_per_part):
    """Partial reduction over one D-tile.

    x_ref  : (G, M, TD)  input tile (any float dtype, upcast to f32 here)
    o_ref  : (M, 1)      per-part partial sum of std over valid columns
    acc_ref: (M, 1) f32  scratch accumulator, persists across the d axis
    """
    p = pl.program_id(0)          # parallel part (megacore split of D)
    d = pl.program_id(1)          # reduction tile within the part

    @pl.when(d == 0)
    def _():
        acc_ref[...] = jnp.zeros_like(acc_ref)

    x = x_ref[...].astype(jnp.float32)                       # (G, M, TD)
    inv_g = jnp.float32(1.0 / groups)
    mean = jnp.sum(x, axis=0) * inv_g                        # E[x]    (M, TD)
    meansq = jnp.sum(x * x, axis=0) * inv_g                  # E[x^2]  (M, TD)
    var = jnp.maximum(meansq - mean * mean, 0.0)             # biased var over G
    std = jnp.sqrt(var + eps)                                # (M, TD)

    # Mask padded tail columns so they don't pollute the mean over D.
    col0 = (p * tiles_per_part + d) * tile_d
    col = col0 + jax.lax.broadcasted_iota(jnp.int32, std.shape, 1)
    std = jnp.where(col < d_valid, std, 0.0)

    # Lane-parallel reduce once per tile; /D and cast happen outside.
    acc_ref[...] += jnp.sum(std, axis=-1, keepdims=True)     # (M, 1)

    @pl.when(d == pl.num_programs(1) - 1)
    def _():
        o_ref[...] = acc_ref[...]


def batch_std(x, groups, epsilon=1e-12, *, tile_d=None,
              vmem_budget_bytes=12 * 1024 * 1024):
    """Pallas implementation of BatchStd.forward. x: (N, C, H, W)."""
    N, C, H, W = x.shape
    G = int(groups)
    assert N % G == 0, "batch must be divisible by groups"
    M = N // G
    D = C * H * W

    # Glue: row-major reshape, identical element ordering to torch.reshape.
    xr = x.reshape(G, M, D)

    itemsize = jnp.dtype(x.dtype).itemsize
    if tile_d is None:
        # Size the D tile so the double-buffered input stays within the VMEM
        # budget on every generation (v5e 16 MiB scoped default, v7x 64 MiB
        # physical). 2 bufs * G * M * TD * itemsize <= vmem_budget_bytes.
        td = vmem_budget_bytes // (2 * G * M * itemsize)
        td = max(128, (td // 128) * 128)
        td = min(td, 16384)
    else:
        td = max(128, (int(tile_d) // 128) * 128)
    td = min(td, pl.cdiv(D, 128) * 128)      # never wider than padded D

    n_tiles = pl.cdiv(D, td)
    # Split the reduction into P coarse parts -> "parallel" grid axis so both
    # TensorCores on v7x stream half the HBM traffic (harmless on 1-TC chips).
    P = 2 if n_tiles >= 2 else 1
    n_tiles = pl.cdiv(n_tiles, P) * P
    tiles_per_part = n_tiles // P
    D_pad = n_tiles * td
    if D_pad != D:
        xr = jnp.pad(xr, ((0, 0), (0, 0), (0, D_pad - D)))

    kernel = functools.partial(
        _batch_std_kernel, eps=float(epsilon), groups=G, d_valid=D,
        tile_d=td, tiles_per_part=tiles_per_part)

    partial_sums = pl.pallas_call(
        kernel,
        out_shape=jax.ShapeDtypeStruct((P, M, 1), jnp.float32),
        grid_spec=pltpu.PrefetchScalarGridSpec(
            num_scalar_prefetch=0,
            grid=(P, tiles_per_part),
            in_specs=[pl.BlockSpec(
                (G, M, td), lambda p, d: (0, 0, p * tiles_per_part + d))],
            out_specs=pl.BlockSpec((None, M, 1), lambda p, d: (p, 0, 0)),
            scratch_shapes=[pltpu.VMEM((M, 1), jnp.float32)],
        ),
        compiler_params=pltpu.CompilerParams(
            dimension_semantics=("parallel", "arbitrary"),
            vmem_limit_bytes=32 * 1024 * 1024,
        ),
    )(xr)

    # Glue: combine the P partial sums, divide by the true D, then replicate
    # the M per-inner-sample scalars the way torch's .repeat(G,1,H,W) does:
    # out[g*M + m, 0, h, w] = stds[m].
    stds = jnp.sum(partial_sums[:, :, 0], axis=0) / D         # (M,)
    per_sample = jnp.tile(stds, (G,))                          # (N,)
    out = jnp.broadcast_to(per_sample.reshape(N, 1, 1, 1), (N, 1, H, W))
    return out.astype(x.dtype)


def _reference(x, groups, epsilon=1e-12):
    """Pure-JAX reference mirroring the PyTorch code line by line."""
    G = groups
    xf = x.astype(jnp.float32)
    o = xf.reshape(G, -1, *x.shape[1:])
    o = o - jnp.mean(o, axis=0, keepdims=True)
    o = jnp.mean(o ** 2, axis=0)
    o = jnp.sqrt(o + epsilon)
    o = jnp.mean(o, axis=(1, 2, 3), keepdims=True)            # (M,1,1,1)
    o = jnp.tile(o, (G, 1, *x.shape[2:]))                      # (N,1,H,W)
    return o.astype(x.dtype)


if __name__ == "__main__":
    key = jax.random.PRNGKey(0)
    k1, k2, k3 = jax.random.split(key, 3)

    # 1) Small shape, D = 1024 (multiple of 128), single tile.
    x1 = jax.random.normal(k1, (8, 4, 16, 16), dtype=jnp.float32)
    o1 = jax.block_until_ready(batch_std(x1, groups=4))
    r1 = jax.block_until_ready(_reference(x1, 4))
    assert o1.shape == (8, 1, 16, 16), o1.shape
    np.testing.assert_allclose(np.asarray(o1), np.asarray(r1),
                               rtol=1e-5, atol=1e-6)

    # 2) D = 300 (NOT a multiple of 128) -> exercises tail-lane masking.
    x2 = jax.random.normal(k2, (8, 3, 10, 10), dtype=jnp.float32)
    o2 = jax.block_until_ready(batch_std(x2, groups=4))
    r2 = jax.block_until_ready(_reference(x2, 4))
    np.testing.assert_allclose(np.asarray(o2), np.asarray(r2),
                               rtol=1e-5, atol=1e-6)

    # 3) Forced small tile -> multi-tile accumulation + 2-part parallel split
    #    (megacore path on v7x), bf16 input DMA with f32 accumulation.
    x3 = jax.random.normal(k3, (8, 8, 32, 32), dtype=jnp.bfloat16)
    o3 = jax.block_until_ready(batch_std(x3, groups=2, tile_d=256))
    r3 = jax.block_until_ready(_reference(x3, 2))
    np.testing.assert_allclose(np.asarray(o3, dtype=np.float32),
                               np.asarray(r3, dtype=np.float32),
                               rtol=2e-2, atol=2e-2)

    print("KERNEL_OK")
</pallas_src>

<mosaic_0001>
module attributes {stable_mosaic.version = 11 : i64} {
  func.func @_batch_std_kernel(%arg0: i32, %arg1: i32, %arg2: memref<4x2x1024xf32, #tpu.memory_space<vmem>>, %arg3: memref<1x2x1xf32, #tpu.memory_space<vmem>>, %arg4: memref<2x1xf32, #tpu.memory_space<vmem>>) attributes {dimension_semantics = [#tpu.dimension_semantics<parallel>, #tpu.dimension_semantics<arbitrary>], iteration_bounds = array<i64: 1, 1>, scalar_prefetch = 0 : i64, scratch_operands = 1 : i64, tpu.core_type = #tpu.core_type<tc>, window_params = [{transform_indices = @transform_0, window_bounds = array<i64: 4, 2, 1024>}, {transform_indices = @transform_1, window_bounds = array<i64: 1, 2, 1>}]} {
    %c0_i32 = arith.constant 0 : i32
    %0 = arith.cmpi eq, %arg1, %c0_i32 : i32
    %1 = arith.extui %0 : i1 to i32
    %c0_i32_0 = arith.constant 0 : i32
    %2 = arith.cmpi ne, %1, %c0_i32_0 : i32
    scf.if %2 {
      %cst_17 = arith.constant 0.000000e+00 : f32
      %36 = vector.broadcast %cst_17 : f32 to vector<2x1xf32>
      %c0_18 = arith.constant 0 : index
      %c0_19 = arith.constant 0 : index
      %37 = vector.load %arg4[%c0_18, %c0_19] : memref<2x1xf32, #tpu.memory_space<vmem>>, vector<2x1xf32>
      tpu.vector_store %arg4[%c0_18, %c0_19], %36 {strides = array<i32>} : memref<2x1xf32, #tpu.memory_space<vmem>>, vector<2x1xf32>,
    } else {
    }
    %c0 = arith.constant 0 : index
    %c0_1 = arith.constant 0 : index
    %c0_2 = arith.constant 0 : index
    %3 = vector.load %arg2[%c0, %c0_1, %c0_2] : memref<4x2x1024xf32, #tpu.memory_space<vmem>>, vector<4x2x1024xf32>
    %cst = arith.constant dense<0.000000e+00> : vector<2x1024xf32>
    %4 = vector.multi_reduction <add>, %3, %cst [0] : vector<4x2x1024xf32> to vector<2x1024xf32>
    %cst_3 = arith.constant 2.500000e-01 : f32
    %5 = vector.broadcast %cst_3 : f32 to vector<2x1024xf32>
    %6 = arith.mulf %4, %5 : vector<2x1024xf32>
    %7 = arith.mulf %3, %3 : vector<4x2x1024xf32>
    %cst_4 = arith.constant dense<0.000000e+00> : vector<2x1024xf32>
    %8 = vector.multi_reduction <add>, %7, %cst_4 [0] : vector<4x2x1024xf32> to vector<2x1024xf32>
    %cst_5 = arith.constant 2.500000e-01 : f32
    %9 = vector.broadcast %cst_5 : f32 to vector<2x1024xf32>
    %10 = arith.mulf %8, %9 : vector<2x1024xf32>
    %11 = arith.mulf %6, %6 : vector<2x1024xf32>
    %12 = arith.subf %10, %11 : vector<2x1024xf32>
    %cst_6 = arith.constant 0.000000e+00 : f32
    %13 = vector.broadcast %cst_6 : f32 to vector<2x1024xf32>
    %14 = arith.maximumf %12, %13 : vector<2x1024xf32>
    %cst_7 = arith.constant 9.99999996E-13 : f32
    %15 = vector.broadcast %cst_7 : f32 to vector<2x1024xf32>
    %16 = arith.addf %14, %15 : vector<2x1024xf32>
    %17 = math.sqrt %16 : vector<2x1024xf32>
    %c1_i32 = arith.constant 1 : i32
    %18 = arith.muli %arg0, %c1_i32 : i32
    %19 = arith.addi %18, %arg1 : i32
    %c1024_i32 = arith.constant 1024 : i32
    %20 = arith.muli %19, %c1024_i32 : i32
    %21 = tpu.iota {dimensions = array<i32: 1>} : vector<2x1024xi32>
    %22 = vector.broadcast %20 : i32 to vector<2x1024xi32>
    %23 = arith.addi %22, %21 : vector<2x1024xi32>
    %c1024_i32_8 = arith.constant 1024 : i32
    %24 = vector.broadcast %c1024_i32_8 : i32 to vector<2x1024xi32>
    %25 = arith.cmpi slt, %23, %24 : vector<2x1024xi32>
    %cst_9 = arith.constant 0.000000e+00 : f32
    %26 = vector.broadcast %cst_9 : f32 to vector<2x1024xf32>
    %27 = arith.select %25, %17, %26 : vector<2x1024xi1>, vector<2x1024xf32>
    %c0_10 = arith.constant 0 : index
    %c0_11 = arith.constant 0 : index
    %28 = vector.load %arg4[%c0_10, %c0_11] : memref<2x1xf32, #tpu.memory_space<vmem>>, vector<2x1xf32>
    %cst_12 = arith.constant dense<0.000000e+00> : vector<2xf32>
    %29 = vector.multi_reduction <add>, %27, %cst_12 [1] : vector<2x1024xf32> to vector<2xf32>
    %30 = vector.shape_cast %29 : vector<2xf32> to vector<2x1xf32>
    %31 = arith.addf %28, %30 : vector<2x1xf32>
    %c0_13 = arith.constant 0 : index
    %c0_14 = arith.constant 0 : index
    %32 = vector.load %arg4[%c0_13, %c0_14] : memref<2x1xf32, #tpu.memory_space<vmem>>, vector<2x1xf32>
    tpu.vector_store %arg4[%c0_13, %c0_14], %31 {strides = array<i32>} : memref<2x1xf32, #tpu.memory_space<vmem>>, vector<2x1xf32>,
    %c0_i32_15 = arith.constant 0 : i32
    %33 = arith.cmpi eq, %arg1, %c0_i32_15 : i32
    %34 = arith.extui %33 : i1 to i32
    %c0_i32_16 = arith.constant 0 : i32
    %35 = arith.cmpi ne, %34, %c0_i32_16 : i32
    scf.if %35 {
      %c0_17 = arith.constant 0 : index
      %c0_18 = arith.constant 0 : index
      %36 = vector.load %arg4[%c0_17, %c0_18] : memref<2x1xf32, #tpu.memory_space<vmem>>, vector<2x1xf32>
      %c0_19 = arith.constant 0 : index
      %c0_20 = arith.constant 0 : index
      %c0_21 = arith.constant 0 : index
      %37 = vector.load %arg3[%c0_19, %c0_20, %c0_21] : memref<1x2x1xf32, #tpu.memory_space<vmem>>, vector<1x2x1xf32>
      %38 = vector.shape_cast %37 : vector<1x2x1xf32> to vector<2x1xf32>
      %39 = vector.shape_cast %36 : vector<2x1xf32> to vector<1x2x1xf32>
      tpu.vector_store %arg3[%c0_19, %c0_20, %c0_21], %39 {strides = array<i32>} : memref<1x2x1xf32, #tpu.memory_space<vmem>>, vector<1x2x1xf32>,
    } else {
    }
    return
  }
  func.func @transform_0(%arg0: i32, %arg1: i32) -> (i32, i32, i32) {
    %c1_i32 = arith.constant 1 : i32
    %0 = arith.muli %arg0, %c1_i32 : i32
    %1 = arith.addi %0, %arg1 : i32
    %c0_i32 = arith.constant 0 : i32
    %c0_i32_0 = arith.constant 0 : i32
    %c0_i32_1 = arith.constant 0 : i32
    return %c0_i32, %c0_i32_0, %1 : i32, i32, i32
  }
  func.func @transform_1(%arg0: i32, %arg1: i32) -> (i32, i32, i32) {
    %c0_i32 = arith.constant 0 : i32
    %c0_i32_0 = arith.constant 0 : i32
    %c0_i32_1 = arith.constant 0 : i32
    return %arg0, %c0_i32, %c0_i32_0 : i32, i32, i32
  }
}

</mosaic_0001>

<llo_original>
// kernel: tpu_custom_call.1
$region0: #{tpu_custom_call.1}
  #allocation0 [shape = 'u32[]', space=smem, size = 0x4, offset = 0x4, fixed_abs, tag = 'smem constant byte address 0x4 - core index']
  #allocation1 [shape = 'u32[144,128]{1,0:T(1,128)}', space=vmem, size = 0x12000, scoped, tag = 'internal scratch']
  #allocation2 [shape = 'f32[2,1]{1,0:T(2,128)}', space=vmem, size = 0x400, scoped, tag = 'scratch operand']
  %s0 = inlined_call_operand.hbm [shape: f32[4,2,1024], index: 0, kind: input, shape index: {}]
  %s1 = inlined_call_operand.vmem [shape: f32[1,2,1], index: 1, kind: output, shape index: {}]
  %s2 = sld [smem:[#allocation0]]
  $region26: #{tpu_custom_call.1} parent=0
    _
  %s4 = ssub.s32 1, %s2
  %s5 = scalar_select 0, %s4, %s2
  $region1: #{tpu_custom_call.1} parent=0
    #allocation3 [shape = 'u8[32768]{0}', space=vmem, size = 0x8000, scoped, tag = 'input window, operand 0, single buffered']
    #allocation4 [shape = 's32[1]{0}', space=sflag, size = 0x4, scoped, tag = 'scoped memory for tpu_custom_call.1']
    %6 = vsyncpa [#allocation4], 0
    // Predicated region
    $region2: #{tpu_custom_call.1} parent=1 // pred_check
      _
    $region3: #{tpu_custom_call.1} parent=1 // pred_check_branch
      %8 = sbr.rel (0) target = $region5
    $region4: #{tpu_custom_call.1} parent=1 // pred_region
      %s9 = sadd.s32 0, 0
      %s10 = smul.u32 8, %s9
      %s12 = ssub.s32 1024, 1024
      %13 = vsyncadd [#allocation4], %s12
      %s14 = smul.addr %s10, 32
      %s15 = scalar_lea.hbm %s0, %s14
      %s16 = sshll.u32 [#allocation3], 4
      %s17 = int_to_ptr.vmem [resolvable:$true] %s16
      %22 = dma.hbm_to_vmem [thread:$0]  %s15, 1024, %s17, [#allocation4], 256, 256, 16
    $region5: #{tpu_custom_call.1} parent=1 // pred_fallthru
      _
    // Predicated region
    $region6: #{tpu_custom_call.1} parent=1 // pred_check
      _
    $region7: #{tpu_custom_call.1} parent=1 // pred_check_branch
      %24 = sbr.rel (0) target = $region9
    $region8: #{tpu_custom_call.1} parent=1 // pred_region
      %25 = dma.done [#allocation4], 1024
    $region9: #{tpu_custom_call.1} parent=1 // pred_fallthru
      _
    %s26 = sadd.s32 0, 0
    %s27 = smul.u32 8, %s26
    %p28 = scmp.eq.s32.totalorder 0, 0
    // Predicated region
    $region10: #{tpu_custom_call.1} parent=1 // pred_check
      %p29 = pneg %p28
    $region11: #{tpu_custom_call.1} parent=1 // pred_check_branch
      %31 = sbr.rel (%p29) target = $region13
    $region12: #{tpu_custom_call.1} parent=1 // pred_region
      %vm32 = vcmask 1024
      %33 = vst.msk [vmem:[#allocation2] sm:$0x3] %vm32, 0.0
    $region13: #{tpu_custom_call.1} parent=1 // pred_fallthru
      _
    %v34 = vld [vmem:[#allocation3] sm:$0xff]
    %v35 = vld [vmem:[#allocation3 + $0x8] sm:$0xff]
    %v36 = vld [vmem:[#allocation3 + $0x10] sm:$0xff]
    %v37 = vld [vmem:[#allocation3 + $0x18] sm:$0xff]
    %v38 = vld [vmem:[#allocation3 + $0x20] sm:$0xff]
    %v39 = vld [vmem:[#allocation3 + $0x28] sm:$0xff]
    %v40 = vld [vmem:[#allocation3 + $0x30] sm:$0xff]
    %v41 = vld [vmem:[#allocation3 + $0x38] sm:$0xff]
    %v50 = vcombine.high %v34, %v34
    %v52 = vunpack.c.l.s4 1983009808
    %v53 = vunpack.c.0.s8 %v52
    %v54 = vlaneseq
    %v55 = vshrl.u32 %v54, 7
    %v56 = vsub.s32 %v53, %v55
    %v57 = vrot.slane %v34, %v56
    %v59 = vunpack.c.l.s4 1983009808
    %v60 = vunpack.c.0.s8 %v59
    %v61 = vlaneseq
    %v62 = vshrl.u32 %v61, 7
    %v63 = vsub.s32 %v60, %v62
    %v64 = vrot.slane %v50, %v63
    %v65 = vcombine.high %v57, %v57
    %v66 = vcombine.high %v64, %v64
    %v67 = vcombine.high %v35, %v35
    %v69 = vunpack.c.l.s4 1983009808
    %v70 = vunpack.c.0.s8 %v69
    %v71 = vlaneseq
    %v72 = vshrl.u32 %v71, 7
    %v73 = vsub.s32 %v70, %v72
    %v74 = vrot.slane %v35, %v73
    %v76 = vunpack.c.l.s4 1983009808
    %v77 = vunpack.c.0.s8 %v76
    %v78 = vlaneseq
    %v79 = vshrl.u32 %v78, 7
    %v80 = vsub.s32 %v77, %v79
    %v81 = vrot.slane %v67, %v80
    %v82 = vcombine.high %v74, %v74
    %v83 = vcombine.high %v81, %v81
    %v84 = vcombine.high %v36, %v36
    %v86 = vunpack.c.l.s4 1983009808
    %v87 = vunpack.c.0.s8 %v86
    %v88 = vlaneseq
    %v89 = vshrl.u32 %v88, 7
    %v90 = vsub.s32 %v87, %v89
    %v91 = vrot.slane %v36, %v90
    %v93 = vunpack.c.l.s4 1983009808
    %v94 = vunpack.c.0.s8 %v93
    %v95 = vlaneseq
    %v96 = vshrl.u32 %v95, 7
    %v97 = vsub.s32 %v94, %v96
    %v98 = vrot.slane %v84, %v97
    %v99 = vcombine.high %v91, %v91
    %v100 = vcombine.high %v98, %v98
    %v101 = vcombine.high %v37, %v37
    %v103 = vunpack.c.l.s4 1983009808
    %v104 = vunpack.c.0.s8 %v103
    %v105 = vlaneseq
    %v106 = vshrl.u32 %v105, 7
    %v107 = vsub.s32 %v104, %v106
    %v108 = vrot.slane %v37, %v107
    %v110 = vunpack.c.l.s4 1983009808
    %v111 = vunpack.c.0.s8 %v110
    %v112 = vlaneseq
    %v113 = vshrl.u32 %v112, 7
    %v114 = vsub.s32 %v111, %v113
    %v115 = vrot.slane %v101, %v114
    %v116 = vcombine.high %v108, %v108
    %v117 = vcombine.high %v115, %v115
    %v118 = vcombine.high %v38, %v38
    %v120 = vunpack.c.l.s4 1983009808
    %v121 = vunpack.c.0.s8 %v120
    %v122 = vlaneseq
    %v123 = vshrl.u32 %v122, 7
    %v124 = vsub.s32 %v121, %v123
    %v125 = vrot.slane %v38, %v124
    %v127 = vunpack.c.l.s4 1983009808
    %v128 = vunpack.c.0.s8 %v127
    %v129 = vlaneseq
    %v130 = vshrl.u32 %v129, 7
    %v131 = vsub.s32 %v128, %v130
    %v132 = vrot.slane %v118, %v131
    %v133 = vcombine.high %v125, %v125
    %v134 = vcombine.high %v132, %v132
    %v135 = vcombine.high %v39, %v39
    %v137 = vunpack.c.l.s4 1983009808
    %v138 = vunpack.c.0.s8 %v137
    %v139 = vlaneseq
    %v140 = vshrl.u32 %v139, 7
    %v141 = vsub.s32 %v138, %v140
    %v142 = vrot.slane %v39, %v141
    %v144 = vunpack.c.l.s4 1983009808
    %v145 = vunpack.c.0.s8 %v144
    %v146 = vlaneseq
    %v147 = vshrl.u32 %v146, 7
    %v148 = vsub.s32 %v145, %v147
    %v149 = vrot.slane %v135, %v148
    %v150 = vcombine.high %v142, %v142
    %v151 = vcombine.high %v149, %v149
    %v152 = vcombine.high %v40, %v40
    %v154 = vunpack.c.l.s4 1983009808
    %v155 = vunpack.c.0.s8 %v154
    %v156 = vlaneseq
    %v157 = vshrl.u32 %v156, 7
    %v158 = vsub.s32 %v155, %v157
    %v159 = vrot.slane %v40, %v158
    %v161 = vunpack.c.l.s4 1983009808
    %v162 = vunpack.c.0.s8 %v161
    %v163 = vlaneseq
    %v164 = vshrl.u32 %v163, 7
    %v165 = vsub.s32 %v162, %v164
    %v166 = vrot.slane %v152, %v165
    %v167 = vcombine.high %v159, %v159
    %v168 = vcombine.high %v166, %v166
    %v169 = vcombine.high %v41, %v41
    %v171 = vunpack.c.l.s4 1983009808
    %v172 = vunpack.c.0.s8 %v171
    %v173 = vlaneseq
    %v174 = vshrl.u32 %v173, 7
    %v175 = vsub.s32 %v172, %v174
    %v176 = vrot.slane %v41, %v175
    %v178 = vunpack.c.l.s4 1983009808
    %v179 = vunpack.c.0.s8 %v178
    %v180 = vlaneseq
    %v181 = vshrl.u32 %v180, 7
    %v182 = vsub.s32 %v179, %v181
    %v183 = vrot.slane %v169, %v182
    %v184 = vcombine.high %v176, %v176
    %v185 = vcombine.high %v183, %v183
    %vm218 = vcmask 1041408
    %v219 = vsel %vm218, %v57, 0.0
    %v220 = vsel %vm218, %v91, 0.0
    %v221 = vadd.f32 %v219, %v220
    %v222 = vsel %vm218, %v125, 0.0
    %v223 = vadd.f32 %v221, %v222
    %v224 = vsel %vm218, %v159, 0.0
    %v225 = vadd.f32 %v223, %v224
    %v226 = vsel %vm218, %v65, 0.0
    %v227 = vsel %vm218, %v99, 0.0
    %v228 = vadd.f32 %v226, %v227
    %v229 = vsel %vm218, %v133, 0.0
    %v230 = vadd.f32 %v228, %v229
    %v231 = vsel %vm218, %v167, 0.0
    %v232 = vadd.f32 %v230, %v231
    %v233 = vsel %vm218, %v64, 0.0
    %v234 = vsel %vm218, %v98, 0.0
    %v235 = vadd.f32 %v233, %v234
    %v236 = vsel %vm218, %v132, 0.0
    %v237 = vadd.f32 %v235, %v236
    %v238 = vsel %vm218, %v166, 0.0
    %v239 = vadd.f32 %v237, %v238
    %v240 = vsel %vm218, %v66, 0.0
    %v241 = vsel %vm218, %v100, 0.0
    %v242 = vadd.f32 %v240, %v241
    %v243 = vsel %vm218, %v134, 0.0
    %v244 = vadd.f32 %v242, %v243
    %v245 = vsel %vm218, %v168, 0.0
    %v246 = vadd.f32 %v244, %v245
    %v247 = vsel %vm218, %v74, 0.0
    %v248 = vsel %vm218, %v108, 0.0
    %v249 = vadd.f32 %v247, %v248
    %v250 = vsel %vm218, %v142, 0.0
    %v251 = vadd.f32 %v249, %v250
    %v252 = vsel %vm218, %v176, 0.0
    %v253 = vadd.f32 %v251, %v252
    %v254 = vsel %vm218, %v82, 0.0
    %v255 = vsel %vm218, %v116, 0.0
    %v256 = vadd.f32 %v254, %v255
    %v257 = vsel %vm218, %v150, 0.0
    %v258 = vadd.f32 %v256, %v257
    %v259 = vsel %vm218, %v184, 0.0
    %v260 = vadd.f32 %v258, %v259
    %v261 = vsel %vm218, %v81, 0.0
    %v262 = vsel %vm218, %v115, 0.0
    %v263 = vadd.f32 %v261, %v262
    %v264 = vsel %vm218, %v149, 0.0
    %v265 = vadd.f32 %v263, %v264
    %v266 = vsel %vm218, %v183, 0.0
    %v267 = vadd.f32 %v265, %v266
    %v268 = vsel %vm218, %v83, 0.0
    %v269 = vsel %vm218, %v117, 0.0
    %v270 = vadd.f32 %v268, %v269
    %v271 = vsel %vm218, %v151, 0.0
    %v272 = vadd.f32 %v270, %v271
    %v273 = vsel %vm218, %v185, 0.0
    %v274 = vadd.f32 %v272, %v273
    %v275 = vmul.f32 %v225, 0.25
    %v276 = vmul.f32 %v232, 0.25
    %v277 = vmul.f32 %v239, 0.25
    %v278 = vmul.f32 %v246, 0.25
    %v279 = vmul.f32 %v253, 0.25
    %v280 = vmul.f32 %v260, 0.25
    %v281 = vmul.f32 %v267, 0.25
    %v282 = vmul.f32 %v274, 0.25
    %v283 = vmul.f32 %v34, %v34
    %v284 = vmul.f32 %v35, %v35
    %v285 = vmul.f32 %v36, %v36
    %v286 = vmul.f32 %v37, %v37
    %v287 = vmul.f32 %v38, %v38
    %v288 = vmul.f32 %v39, %v39
    %v289 = vmul.f32 %v40, %v40
    %v290 = vmul.f32 %v41, %v41
    %v299 = vcombine.high %v283, %v283
    %v301 = vunpack.c.l.s4 1983009808
    %v302 = vunpack.c.0.s8 %v301
    %v303 = vlaneseq
    %v304 = vshrl.u32 %v303, 7
    %v305 = vsub.s32 %v302, %v304
    %v306 = vrot.slane %v283, %v305
    %v308 = vunpack.c.l.s4 1983009808
    %v309 = vunpack.c.0.s8 %v308
    %v310 = vlaneseq
    %v311 = vshrl.u32 %v310, 7
    %v312 = vsub.s32 %v309, %v311
    %v313 = vrot.slane %v299, %v312
    %v314 = vcombine.high %v306, %v306
    %v315 = vcombine.high %v313, %v313
    %v316 = vcombine.high %v284, %v284
    %v318 = vunpack.c.l.s4 1983009808
    %v319 = vunpack.c.0.s8 %v318
    %v320 = vlaneseq
    %v321 = vshrl.u32 %v320, 7
    %v322 = vsub.s32 %v319, %v321
    %v323 = vrot.slane %v284, %v322
    %v325 = vunpack.c.l.s4 1983009808
    %v326 = vunpack.c.0.s8 %v325
    %v327 = vlaneseq
    %v328 = vshrl.u32 %v327, 7
    %v329 = vsub.s32 %v326, %v328
    %v330 = vrot.slane %v316, %v329
    %v331 = vcombine.high %v323, %v323
    %v332 = vcombine.high %v330, %v330
    %v333 = vcombine.high %v285, %v285
    %v335 = vunpack.c.l.s4 1983009808
    %v336 = vunpack.c.0.s8 %v335
    %v337 = vlaneseq
    %v338 = vshrl.u32 %v337, 7
    %v339 = vsub.s32 %v336, %v338
    %v340 = vrot.slane %v285, %v339
    %v342 = vunpack.c.l.s4 1983009808
    %v343 = vunpack.c.0.s8 %v342
    %v344 = vlaneseq
    %v345 = vshrl.u32 %v344, 7
    %v346 = vsub.s32 %v343, %v345
    %v347 = vrot.slane %v333, %v346
    %v348 = vcombine.high %v340, %v340
    %v349 = vcombine.high %v347, %v347
    %v350 = vcombine.high %v286, %v286
    %v352 = vunpack.c.l.s4 1983009808
    %v353 = vunpack.c.0.s8 %v352
    %v354 = vlaneseq
    %v355 = vshrl.u32 %v354, 7
    %v356 = vsub.s32 %v353, %v355
    %v357 = vrot.slane %v286, %v356
    %v359 = vunpack.c.l.s4 1983009808
    %v360 = vunpack.c.0.s8 %v359
    %v361 = vlaneseq
    %v362 = vshrl.u32 %v361, 7
    %v363 = vsub.s32 %v360, %v362
    %v364 = vrot.slane %v350, %v363
    %v365 = vcombine.high %v357, %v357
    %v366 = vcombine.high %v364, %v364
    %v367 = vcombine.high %v287, %v287
    %v369 = vunpack.c.l.s4 1983009808
    %v370 = vunpack.c.0.s8 %v369
    %v371 = vlaneseq
    %v372 = vshrl.u32 %v371, 7
    %v373 = vsub.s32 %v370, %v372
    %v374 = vrot.slane %v287, %v373
    %v376 = vunpack.c.l.s4 1983009808
    %v377 = vunpack.c.0.s8 %v376
    %v378 = vlaneseq
    %v379 = vshrl.u32 %v378, 7
    %v380 = vsub.s32 %v377, %v379
    %v381 = vrot.slane %v367, %v380
    %v382 = vcombine.high %v374, %v374
    %v383 = vcombine.high %v381, %v381
    %v384 = vcombine.high %v288, %v288
    %v386 = vunpack.c.l.s4 1983009808
    %v387 = vunpack.c.0.s8 %v386
    %v388 = vlaneseq
    %v389 = vshrl.u32 %v388, 7
    %v390 = vsub.s32 %v387, %v389
    %v391 = vrot.slane %v288, %v390
    %v393 = vunpack.c.l.s4 1983009808
    %v394 = vunpack.c.0.s8 %v393
    %v395 = vlaneseq
    %v396 = vshrl.u32 %v395, 7
    %v397 = vsub.s32 %v394, %v396
    %v398 = vrot.slane %v384, %v397
    %v399 = vcombine.high %v391, %v391
    %v400 = vcombine.high %v398, %v398
    %v401 = vcombine.high %v289, %v289
    %v403 = vunpack.c.l.s4 1983009808
    %v404 = vunpack.c.0.s8 %v403
    %v405 = vlaneseq
    %v406 = vshrl.u32 %v405, 7
    %v407 = vsub.s32 %v404, %v406
    %v408 = vrot.slane %v289, %v407
    %v410 = vunpack.c.l.s4 1983009808
    %v411 = vunpack.c.0.s8 %v410
    %v412 = vlaneseq
    %v413 = vshrl.u32 %v412, 7
    %v414 = vsub.s32 %v411, %v413
    %v415 = vrot.slane %v401, %v414
    %v416 = vcombine.high %v408, %v408
    %v417 = vcombine.high %v415, %v415
    %v418 = vcombine.high %v290, %v290
    %v420 = vunpack.c.l.s4 1983009808
    %v421 = vunpack.c.0.s8 %v420
    %v422 = vlaneseq
    %v423 = vshrl.u32 %v422, 7
    %v424 = vsub.s32 %v421, %v423
    %v425 = vrot.slane %v290, %v424
    %v427 = vunpack.c.l.s4 1983009808
    %v428 = vunpack.c.0.s8 %v427
    %v429 = vlaneseq
    %v430 = vshrl.u32 %v429, 7
    %v431 = vsub.s32 %v428, %v430
    %v432 = vrot.slane %v418, %v431
    %v433 = vcombine.high %v425, %v425
    %v434 = vcombine.high %v432, %v432
    %v467 = vsel %vm218, %v306, 0.0
    %v468 = vsel %vm218, %v340, 0.0
    %v469 = vadd.f32 %v467, %v468
    %v470 = vsel %vm218, %v374, 0.0
    %v471 = vadd.f32 %v469, %v470
    %v472 = vsel %vm218, %v408, 0.0
    %v473 = vadd.f32 %v471, %v472
    %v474 = vsel %vm218, %v314, 0.0
    %v475 = vsel %vm218, %v348, 0.0
    %v476 = vadd.f32 %v474, %v475
    %v477 = vsel %vm218, %v382, 0.0
    %v478 = vadd.f32 %v476, %v477
    %v479 = vsel %vm218, %v416, 0.0
    %v480 = vadd.f32 %v478, %v479
    %v481 = vsel %vm218, %v313, 0.0
    %v482 = vsel %vm218, %v347, 0.0
    %v483 = vadd.f32 %v481, %v482
    %v484 = vsel %vm218, %v381, 0.0
    %v485 = vadd.f32 %v483, %v484
    %v486 = vsel %vm218, %v415, 0.0
    %v487 = vadd.f32 %v485, %v486
    %v488 = vsel %vm218, %v315, 0.0
    %v489 = vsel %vm218, %v349, 0.0
    %v490 = vadd.f32 %v488, %v489
    %v491 = vsel %vm218, %v383, 0.0
    %v492 = vadd.f32 %v490, %v491
    %v493 = vsel %vm218, %v417, 0.0
    %v494 = vadd.f32 %v492, %v493
    %v495 = vsel %vm218, %v323, 0.0
    %v496 = vsel %vm218, %v357, 0.0
    %v497 = vadd.f32 %v495, %v496
    %v498 = vsel %vm218, %v391, 0.0
    %v499 = vadd.f32 %v497, %v498
    %v500 = vsel %vm218, %v425, 0.0
    %v501 = vadd.f32 %v499, %v500
    %v502 = vsel %vm218, %v331, 0.0
    %v503 = vsel %vm218, %v365, 0.0
    %v504 = vadd.f32 %v502, %v503
    %v505 = vsel %vm218, %v399, 0.0
    %v506 = vadd.f32 %v504, %v505
    %v507 = vsel %vm218, %v433, 0.0
    %v508 = vadd.f32 %v506, %v507
    %v509 = vsel %vm218, %v330, 0.0
    %v510 = vsel %vm218, %v364, 0.0
    %v511 = vadd.f32 %v509, %v510
    %v512 = vsel %vm218, %v398, 0.0
    %v513 = vadd.f32 %v511, %v512
    %v514 = vsel %vm218, %v432, 0.0
    %v515 = vadd.f32 %v513, %v514
    %v516 = vsel %vm218, %v332, 0.0
    %v517 = vsel %vm218, %v366, 0.0
    %v518 = vadd.f32 %v516, %v517
    %v519 = vsel %vm218, %v400, 0.0
    %v520 = vadd.f32 %v518, %v519
    %v521 = vsel %vm218, %v434, 0.0
    %v522 = vadd.f32 %v520, %v521
    %v523 = vmul.f32 %v473, 0.25
    %v524 = vmul.f32 %v480, 0.25
    %v525 = vmul.f32 %v487, 0.25
    %v526 = vmul.f32 %v494, 0.25
    %v527 = vmul.f32 %v501, 0.25
    %v528 = vmul.f32 %v508, 0.25
    %v529 = vmul.f32 %v515, 0.25
    %v530 = vmul.f32 %v522, 0.25
    %v531 = vmul.f32 %v275, %v275
    %v532 = vmul.f32 %v276, %v276
    %v533 = vmul.f32 %v277, %v277
    %v534 = vmul.f32 %v278, %v278
    %v535 = vmul.f32 %v279, %v279
    %v536 = vmul.f32 %v280, %v280
    %v537 = vmul.f32 %v281, %v281
    %v538 = vmul.f32 %v282, %v282
    %v539 = vsub.f32 %v523, %v531
    %v540 = vsub.f32 %v524, %v532
    %v541 = vsub.f32 %v525, %v533
    %v542 = vsub.f32 %v526, %v534
    %v543 = vsub.f32 %v527, %v535
    %v544 = vsub.f32 %v528, %v536
    %v545 = vsub.f32 %v529, %v537
    %v546 = vsub.f32 %v530, %v538
    %v547 = vmax.f32 %v539, 0.0
    %v548 = vmax.f32 %v540, 0.0
    %v549 = vmax.f32 %v541, 0.0
    %v550 = vmax.f32 %v542, 0.0
    %v551 = vmax.f32 %v543, 0.0
    %v552 = vmax.f32 %v544, 0.0
    %v553 = vmax.f32 %v545, 0.0
    %v554 = vmax.f32 %v546, 0.0
    %v555 = vadd.f32 %v547, 1e-12
    %v556 = vadd.f32 %v548, 1e-12
    %v557 = vadd.f32 %v549, 1e-12
    %v558 = vadd.f32 %v550, 1e-12
    %v559 = vadd.f32 %v551, 1e-12
    %v560 = vadd.f32 %v552, 1e-12
    %v561 = vadd.f32 %v553, 1e-12
    %v562 = vadd.f32 %v554, 1e-12
    %v563 = vrsqrt.pop %v555
    %v564 = vmul.f32 %v555, %v563
    %vm565 = vcmp.eq.f32.partialorder %v555, inf
    %v566 = vsel %vm565, %v555, %v564
    %vm567 = vcmp.eq.f32.partialorder %v555, 0.0
    %v568 = vand.u32 %v555, 2147483648
    %v569 = vsel %vm567, %v568, %v566
    %v570 = vrsqrt.pop %v556
    %v571 = vmul.f32 %v556, %v570
    %vm572 = vcmp.eq.f32.partialorder %v556, inf
    %v573 = vsel %vm572, %v556, %v571
    %vm574 = vcmp.eq.f32.partialorder %v556, 0.0
    %v575 = vand.u32 %v556, 2147483648
    %v576 = vsel %vm574, %v575, %v573
    %v577 = vrsqrt.pop %v557
    %v578 = vmul.f32 %v557, %v577
    %vm579 = vcmp.eq.f32.partialorder %v557, inf
    %v580 = vsel %vm579, %v557, %v578
    %vm581 = vcmp.eq.f32.partialorder %v557, 0.0
    %v582 = vand.u32 %v557, 2147483648
    %v583 = vsel %vm581, %v582, %v580
    %v584 = vrsqrt.pop %v558
    %v585 = vmul.f32 %v558, %v584
    %vm586 = vcmp.eq.f32.partialorder %v558, inf
    %v587 = vsel %vm586, %v558, %v585
    %vm588 = vcmp.eq.f32.partialorder %v558, 0.0
    %v589 = vand.u32 %v558, 2147483648
    %v590 = vsel %vm588, %v589, %v587
    %v591 = vrsqrt.pop %v559
    %v592 = vmul.f32 %v559, %v591
    %vm593 = vcmp.eq.f32.partialorder %v559, inf
    %v594 = vsel %vm593, %v559, %v592
    %vm595 = vcmp.eq.f32.partialorder %v559, 0.0
    %v596 = vand.u32 %v559, 2147483648
    %v597 = vsel %vm595, %v596, %v594
    %v598 = vrsqrt.pop %v560
    %v599 = vmul.f32 %v560, %v598
    %vm600 = vcmp.eq.f32.partialorder %v560, inf
    %v601 = vsel %vm600, %v560, %v599
    %vm602 = vcmp.eq.f32.partialorder %v560, 0.0
    %v603 = vand.u32 %v560, 2147483648
    %v604 = vsel %vm602, %v603, %v601
    %v605 = vrsqrt.pop %v561
    %v606 = vmul.f32 %v561, %v605
    %vm607 = vcmp.eq.f32.partialorder %v561, inf
    %v608 = vsel %vm607, %v561, %v606
    %vm609 = vcmp.eq.f32.partialorder %v561, 0.0
    %v610 = vand.u32 %v561, 2147483648
    %v611 = vsel %vm609, %v610, %v608
    %v612 = vrsqrt.pop %v562
    %v613 = vmul.f32 %v562, %v612
    %vm614 = vcmp.eq.f32.partialorder %v562, inf
    %v615 = vsel %vm614, %v562, %v613
    %vm616 = vcmp.eq.f32.partialorder %v562, 0.0
    %v617 = vand.u32 %v562, 2147483648
    %v618 = vsel %vm616, %v617, %v615
    %s619 = sadd.s32 0, 0
    %s620 = smul.u32 %s619, 1024
    %v621 = vlaneseq
    %v622 = vand.u32 %v621, 127
    %v623 = vadd.s32 %v622, 128
    %v624 = vadd.s32 %v622, 256
    %v625 = vadd.s32 %v622, 384
    %v626 = vadd.s32 %v622, 512
    %v627 = vadd.s32 %v622, 640
    %v628 = vadd.s32 %v622, 768
    %v629 = vadd.s32 %v622, 896
    %v630 = vstv %s620
    %v631 = vadd.s32 %v630, %v622
    %v632 = vadd.s32 %v630, %v623
    %v633 = vadd.s32 %v630, %v624
    %v634 = vadd.s32 %v630, %v625
    %v635 = vadd.s32 %v630, %v626
    %v636 = vadd.s32 %v630, %v627
    %v637 = vadd.s32 %v630, %v628
    %v638 = vadd.s32 %v630, %v629
    %vm639 = vcmp.lt.s32.totalorder %v631, 1024
    %vm640 = vcmp.lt.s32.totalorder %v632, 1024
    %vm641 = vcmp.lt.s32.totalorder %v633, 1024
    %vm642 = vcmp.lt.s32.totalorder %v634, 1024
    %vm643 = vcmp.lt.s32.totalorder %v635, 1024
    %vm644 = vcmp.lt.s32.totalorder %v636, 1024
    %vm645 = vcmp.lt.s32.totalorder %v637, 1024
    %vm646 = vcmp.lt.s32.totalorder %v638, 1024
    %v647 = vsel %vm639, %v569, 0.0
    %v648 = vsel %vm640, %v576, 0.0
    %v649 = vsel %vm641, %v583, 0.0
    %v650 = vsel %vm642, %v590, 0.0
    %v651 = vsel %vm643, %v597, 0.0
    %v652 = vsel %vm644, %v604, 0.0
    %v653 = vsel %vm645, %v611, 0.0
    %v654 = vsel %vm646, %v618, 0.0
    %v655 = vld [vmem:[#allocation2] sm:$0x3]
    %v656 = vsel %vm218, %v647, 0.0
    %v657 = vsel %vm218, %v648, 0.0
    %v658 = vadd.f32 %v656, %v657
    %v659 = vsel %vm218, %v649, 0.0
    %v660 = vadd.f32 %v658, %v659
    %v661 = vsel %vm218, %v650, 0.0
    %v662 = vadd.f32 %v660, %v661
    %v663 = vsel %vm218, %v651, 0.0
    %v664 = vadd.f32 %v662, %v663
    %v665 = vsel %vm218, %v652, 0.0
    %v666 = vadd.f32 %v664, %v665
    %v667 = vsel %vm218, %v653, 0.0
    %v668 = vadd.f32 %v666, %v667
    %v669 = vsel %vm218, %v654, 0.0
    %v670 = vadd.f32 %v668, %v669
    %671 = vadd.xlane.f32.xlu0 %v670
    %v672 = vpop.xlane.xlu0 %671
    %v673 = vadd.f32 %v655, %v672
    %vm674 = vcmask 1024
    %675 = vst.msk [vmem:[#allocation2] sm:$0x3] %vm674, %v673
    // Predicated region
    $region14: #{tpu_custom_call.1} parent=1 // pred_check
      %p676 = pneg %p28
    $region15: #{tpu_custom_call.1} parent=1 // pred_check_branch
      %678 = sbr.rel (%p676) target = $region17
    $region16: #{tpu_custom_call.1} parent=1 // pred_region
      %v679 = vld [vmem:[#allocation2] sm:$0x3]
      %680 = vst.msk [vmem:[%s1] sm:$0x3] %vm674, %v679
    $region17: #{tpu_custom_call.1} parent=1 // pred_fallthru
      _
    // Predicated region
    $region18: #{tpu_custom_call.1} parent=1 // pred_check
      _
    $region19: #{tpu_custom_call.1} parent=1 // pred_check_branch
      %682 = sbr.rel (0) target = $region21
    $region20: #{tpu_custom_call.1} parent=1 // pred_region
      _
    $region21: #{tpu_custom_call.1} parent=1 // pred_fallthru
      _
    // Predicated region
    $region22: #{tpu_custom_call.1} parent=1 // pred_check
      _
    $region23: #{tpu_custom_call.1} parent=1 // pred_check_branch
      %684 = sbr.rel (0) target = $region25
    $region24: #{tpu_custom_call.1} parent=1 // pred_region
      _
    $region25: #{tpu_custom_call.1} parent=1 // pred_fallthru
      _
    %685 = vsyncpa [#allocation4], 1

</llo_original>
